<compile_context>
chip_gen: v7x
topology: tpu7x:2x2x1
jax: 0.10.0
libtpu: 0.0.40
codegen_flags: <defaults>
</compile_context>

<pallas_src>
import functools

import jax
import jax.numpy as jnp
from jax import lax
from jax.experimental import pallas as pl
from jax.experimental.pallas import tpu as pltpu


def _focal_loss_kernel(logits_ref, targets_ref, alpha_ref, out_ref, *,
                       gamma, n_total):
    logits = logits_ref[...].astype(jnp.float32)       # (TN, C) f32 compute
    targets = targets_ref[...]                         # (TN, 1) i32
    alpha = alpha_ref[...].astype(jnp.float32)         # (1, C)  f32

    tn, c = logits.shape

    # Numerically stable log-sum-exp per row.
    row_max = jnp.max(logits, axis=-1, keepdims=True)                    # (TN,1)
    lse = jnp.log(jnp.sum(jnp.exp(logits - row_max), axis=-1, keepdims=True))

    # One-hot gather of the target logit and per-class alpha.
    class_ids = lax.broadcasted_iota(jnp.int32, (tn, c), dimension=1)    # (TN,C)
    onehot = (class_ids == targets).astype(jnp.float32)                  # (TN,C)
    target_logit = jnp.sum(logits * onehot, axis=-1, keepdims=True)      # (TN,1)
    alpha_t = jnp.sum(alpha * onehot, axis=-1, keepdims=True)            # (TN,1)

    # ce = -log_softmax[target] without materializing the full log_softmax.
    # (Out-of-range targets give alpha_t == 0 -> contribute 0, matching the
    #  previous version's behavior.)
    ce = (lse + row_max) - target_logit                                  # (TN,1)
    prob = jnp.exp(-ce)
    focal = alpha_t * jnp.maximum(1.0 - prob, 0.0) ** gamma * ce         # (TN,1)

    # Zero out padded remainder rows of the last tile (NaN-safe via select).
    row = pl.program_id(0) * tn + lax.broadcasted_iota(jnp.int32, (tn, 1), 0)
    focal = jnp.where(row < n_total, focal, 0.0)

    # Lane-dense store of the per-tile partial sum (broadcast over 128 lanes).
    out_ref[...] = jnp.zeros_like(out_ref) + jnp.sum(focal)


def focal_loss(logits, targets, alpha, gamma=2, *, tile_rows=None,
               vmem_tile_bytes=4 * 1024 * 1024):
    """Pallas TPU implementation of FocalLoss.forward.

    logits:  (N, C) float32 or bfloat16 (kept in native dtype for the DMA)
    targets: (N,)   int class indices in [0, C)
    alpha:   (C,)   per-class weights
    returns: scalar float32 mean focal loss
    """
    n, c = logits.shape
    targets_2d = targets.reshape(n, 1).astype(jnp.int32)
    alpha_2d = jnp.asarray(alpha, jnp.float32).reshape(1, c)

    itemsize = jnp.dtype(logits.dtype).itemsize
    if tile_rows is None:
        # ~4 MiB per logits buffer; multiple of 8 sublanes.
        tile_rows = max(8, (vmem_tile_bytes // max(1, c * itemsize)) // 8 * 8)
    if n <= tile_rows:
        tn = n                              # single full-extent block
    else:
        tn = max(8, (tile_rows // 8) * 8)   # sublane-aligned batch tile
    num_tiles = pl.cdiv(n, tn)

    kernel = functools.partial(_focal_loss_kernel, gamma=gamma, n_total=n)

    cost = pl.CostEstimate(
        flops=10 * n * c,
        transcendentals=n * c + 2 * n,
        bytes_accessed=n * c * itemsize + n * 4 + c * 4 + num_tiles * 128 * 4,
    )

    partials = pl.pallas_call(
        kernel,
        out_shape=jax.ShapeDtypeStruct((num_tiles, 1, 128), jnp.float32),
        grid=(num_tiles,),
        in_specs=[
            pl.BlockSpec((tn, c), lambda i: (i, 0)),   # logits batch tile
            pl.BlockSpec((tn, 1), lambda i: (i, 0)),   # targets batch tile
            pl.BlockSpec((1, c), lambda i: (0, 0)),    # alpha, resident
        ],
        out_specs=pl.BlockSpec((1, 1, 128), lambda i: (i, 0, 0)),
        compiler_params=pltpu.CompilerParams(
            dimension_semantics=("parallel",)),
        cost_estimate=cost,
    )(logits, targets_2d, alpha_2d)

    # Final reduction over tiles + divide by the GLOBAL batch size.
    return jnp.sum(partials[:, 0, 0]) / jnp.float32(n)


def focal_loss_ref(logits, targets, alpha, gamma=2):
    """Pure-JAX reference matching the PyTorch module semantics."""
    log_softmax = jax.nn.log_softmax(logits.astype(jnp.float32), axis=-1)
    log_prob = -jnp.take_along_axis(log_softmax, targets[:, None], axis=-1)[:, 0]
    prob = jnp.exp(-log_prob)
    focal = alpha[targets] * (1.0 - prob) ** gamma * log_prob
    return jnp.mean(focal)


if __name__ == "__main__":
    key = jax.random.PRNGKey(0)
    k1, k2, k3, k4 = jax.random.split(key, 4)

    # Small case matching the module: batch=8 samples, 4 classes.
    N, C = 8, 4
    logits = jax.random.normal(k1, (N, C), dtype=jnp.float32)
    targets = jax.random.randint(k2, (N,), 0, C, dtype=jnp.int32)
    alpha = jnp.array([0.25, 0.5, 0.75, 1.0], dtype=jnp.float32)
    gamma = 2

    out = focal_loss(logits, targets, alpha, gamma=gamma)
    jax.block_until_ready(out)
    ref = focal_loss_ref(logits, targets, alpha, gamma=gamma)
    assert jnp.allclose(out, ref, rtol=1e-5, atol=1e-6), (out, ref)

    # Multi-tile + remainder-mask path: force TN=8 over N=20 -> 3 tiles with
    # 4 padded rows in the last tile.
    N2 = 20
    logits2 = jax.random.normal(k3, (N2, C), dtype=jnp.float32)
    targets2 = jax.random.randint(k4, (N2,), 0, C, dtype=jnp.int32)
    out2 = focal_loss(logits2, targets2, alpha, gamma=gamma, tile_rows=8)
    jax.block_until_ready(out2)
    ref2 = focal_loss_ref(logits2, targets2, alpha, gamma=gamma)
    assert jnp.allclose(out2, ref2, rtol=1e-5, atol=1e-6), (out2, ref2)

    print("KERNEL_OK")
</pallas_src>

<mosaic_0001>
module attributes {stable_mosaic.version = 11 : i64} {
  func.func @_focal_loss_kernel(%arg0: i32, %arg1: memref<8x4xf32, #tpu.memory_space<vmem>>, %arg2: memref<8x1xi32, #tpu.memory_space<vmem>>, %arg3: memref<1x4xf32, #tpu.memory_space<vmem>>, %arg4: memref<1x1x128xf32, #tpu.memory_space<vmem>>) attributes {dimension_semantics = [#tpu.dimension_semantics<parallel>], iteration_bounds = array<i64: 1>, scalar_prefetch = 0 : i64, scratch_operands = 0 : i64, tpu.core_type = #tpu.core_type<tc>, window_params = [{transform_indices = @transform_0, window_bounds = array<i64: 8, 4>}, {transform_indices = @transform_1, window_bounds = array<i64: 8, 1>}, {pipeline_mode = #tpu.pipeline_mode<synchronous>, transform_indices = @transform_2, window_bounds = array<i64: 1, 4>}, {transform_indices = @transform_3, window_bounds = array<i64: 1, 1, 128>}]} {
    %c0 = arith.constant 0 : index
    %c0_0 = arith.constant 0 : index
    %0 = vector.load %arg1[%c0, %c0_0] : memref<8x4xf32, #tpu.memory_space<vmem>>, vector<8x4xf32>
    %c0_1 = arith.constant 0 : index
    %c0_2 = arith.constant 0 : index
    %1 = vector.load %arg2[%c0_1, %c0_2] : memref<8x1xi32, #tpu.memory_space<vmem>>, vector<8x1xi32>
    %c0_3 = arith.constant 0 : index
    %c0_4 = arith.constant 0 : index
    %2 = vector.load %arg3[%c0_3, %c0_4] : memref<1x4xf32, #tpu.memory_space<vmem>>, vector<1x4xf32>
    %cst = arith.constant dense<0xFF800000> : vector<8xf32>
    %3 = vector.multi_reduction <maximumf>, %0, %cst [1] : vector<8x4xf32> to vector<8xf32>
    %4 = vector.shape_cast %3 : vector<8xf32> to vector<8x1xf32>
    %5 = vector.broadcast %4 : vector<8x1xf32> to vector<8x4xf32>
    %6 = arith.subf %0, %5 : vector<8x4xf32>
    %7 = math.exp %6 : vector<8x4xf32>
    %cst_5 = arith.constant dense<0.000000e+00> : vector<8xf32>
    %8 = vector.multi_reduction <add>, %7, %cst_5 [1] : vector<8x4xf32> to vector<8xf32>
    %9 = vector.shape_cast %8 : vector<8xf32> to vector<8x1xf32>
    %10 = math.log %9 : vector<8x1xf32>
    %11 = tpu.iota {dimensions = array<i32: 1>} : vector<8x4xi32>
    %12 = vector.broadcast %1 : vector<8x1xi32> to vector<8x4xi32>
    %13 = arith.cmpi eq, %11, %12 : vector<8x4xi32>
    %14 = arith.extui %13 : vector<8x4xi1> to vector<8x4xi32>
    %15 = arith.sitofp %14 : vector<8x4xi32> to vector<8x4xf32>
    %16 = arith.mulf %0, %15 : vector<8x4xf32>
    %cst_6 = arith.constant dense<0.000000e+00> : vector<8xf32>
    %17 = vector.multi_reduction <add>, %16, %cst_6 [1] : vector<8x4xf32> to vector<8xf32>
    %18 = vector.shape_cast %17 : vector<8xf32> to vector<8x1xf32>
    %19 = vector.broadcast %2 : vector<1x4xf32> to vector<8x4xf32>
    %20 = arith.mulf %19, %15 : vector<8x4xf32>
    %cst_7 = arith.constant dense<0.000000e+00> : vector<8xf32>
    %21 = vector.multi_reduction <add>, %20, %cst_7 [1] : vector<8x4xf32> to vector<8xf32>
    %22 = vector.shape_cast %21 : vector<8xf32> to vector<8x1xf32>
    %23 = arith.addf %10, %4 : vector<8x1xf32>
    %24 = arith.subf %23, %18 : vector<8x1xf32>
    %cst_8 = arith.constant 0.000000e+00 : f32
    %25 = vector.broadcast %cst_8 : f32 to vector<8x1xf32>
    %26 = arith.subf %25, %24 : vector<8x1xf32>
    %27 = math.exp %26 : vector<8x1xf32>
    %cst_9 = arith.constant 1.000000e+00 : f32
    %28 = vector.broadcast %cst_9 : f32 to vector<8x1xf32>
    %29 = arith.subf %28, %27 : vector<8x1xf32>
    %cst_10 = arith.constant 0.000000e+00 : f32
    %30 = vector.broadcast %cst_10 : f32 to vector<8x1xf32>
    %31 = arith.maximumf %29, %30 : vector<8x1xf32>
    %32 = arith.mulf %31, %31 : vector<8x1xf32>
    %33 = arith.mulf %22, %32 : vector<8x1xf32>
    %34 = arith.mulf %33, %24 : vector<8x1xf32>
    %c8_i32 = arith.constant 8 : i32
    %35 = arith.muli %arg0, %c8_i32 : i32
    %36 = tpu.iota {dimensions = array<i32: 0>} : vector<8x1xi32>
    %37 = vector.broadcast %35 : i32 to vector<8x1xi32>
    %38 = arith.addi %37, %36 : vector<8x1xi32>
    %c8_i32_11 = arith.constant 8 : i32
    %39 = vector.broadcast %c8_i32_11 : i32 to vector<8x1xi32>
    %40 = arith.cmpi slt, %38, %39 : vector<8x1xi32>
    %cst_12 = arith.constant 0.000000e+00 : f32
    %41 = vector.broadcast %cst_12 : f32 to vector<8x1xf32>
    %42 = arith.select %40, %34, %41 : vector<8x1xi1>, vector<8x1xf32>
    %cst_13 = arith.constant 0.000000e+00 : f32
    %43 = vector.broadcast %cst_13 : f32 to vector<1x1x128xf32>
    %44 = vector.shape_cast %42 : vector<8x1xf32> to vector<1x8x1xf32>
    %cst_14 = arith.constant dense<0.000000e+00> : vector<1xf32>
    %45 = vector.multi_reduction <add>, %44, %cst_14 [1, 2] : vector<1x8x1xf32> to vector<1xf32>
    %46 = vector.shape_cast %45 : vector<1xf32> to vector<1x1x1xf32>
    %47 = vector.extract %46[0, 0, 0] : f32 from vector<1x1x1xf32>
    %48 = vector.broadcast %47 : f32 to vector<1x1x128xf32>
    %49 = arith.addf %43, %48 : vector<1x1x128xf32>
    %c0_15 = arith.constant 0 : index
    %c0_16 = arith.constant 0 : index
    %c0_17 = arith.constant 0 : index
    %50 = vector.load %arg4[%c0_15, %c0_16, %c0_17] : memref<1x1x128xf32, #tpu.memory_space<vmem>>, vector<1x1x128xf32>
    tpu.vector_store %arg4[%c0_15, %c0_16, %c0_17], %49 {strides = array<i32>} : memref<1x1x128xf32, #tpu.memory_space<vmem>>, vector<1x1x128xf32>,
    return
  }
  func.func @transform_0(%arg0: i32) -> (i32, i32) {
    %c0_i32 = arith.constant 0 : i32
    %c0_i32_0 = arith.constant 0 : i32
    return %arg0, %c0_i32 : i32, i32
  }
  func.func @transform_1(%arg0: i32) -> (i32, i32) {
    %c0_i32 = arith.constant 0 : i32
    %c0_i32_0 = arith.constant 0 : i32
    return %arg0, %c0_i32 : i32, i32
  }
  func.func @transform_2(%arg0: i32) -> (i32, i32) {
    %c0_i32 = arith.constant 0 : i32
    %c0_i32_0 = arith.constant 0 : i32
    %c0_i32_1 = arith.constant 0 : i32
    return %c0_i32, %c0_i32_0 : i32, i32
  }
  func.func @transform_3(%arg0: i32) -> (i32, i32, i32) {
    %c0_i32 = arith.constant 0 : i32
    %c0_i32_0 = arith.constant 0 : i32
    %c0_i32_1 = arith.constant 0 : i32
    return %arg0, %c0_i32, %c0_i32_0 : i32, i32, i32
  }
}

</mosaic_0001>

<llo_original>
// kernel: tpu_custom_call.1
$region0: #{tpu_custom_call.1}
  #allocation0 [shape = 'u32[]', space=smem, size = 0x4, offset = 0x4, fixed_abs, tag = 'smem constant byte address 0x4 - core index']
  #allocation1 [shape = 'u32[144,128]{1,0:T(1,128)}', space=vmem, size = 0x12000, scoped, tag = 'internal scratch']
  %s0 = inlined_call_operand.vmem [shape: f32[8,4], index: 0, kind: input, shape index: {}]
  %s1 = inlined_call_operand.vmem [shape: s32[8,1], index: 1, kind: input, shape index: {}]
  %s2 = inlined_call_operand.vmem [shape: f32[1,4], index: 2, kind: input, shape index: {}]
  %s3 = inlined_call_operand.hbm [shape: f32[1,1,128], index: 3, kind: output, shape index: {}]
  %s4 = sld [smem:[#allocation0]]
  $region22: #{tpu_custom_call.1} parent=0
    _
  %s6 = ssub.s32 1, %s4
  %s7 = scalar_select 0, %s6, %s4
  $region1: #{tpu_custom_call.1} parent=0
    #allocation2 [shape = 'u8[512]{0}', space=vmem, size = 0x400, scoped, tag = 'output window, operand 0, single buffered']
    #allocation3 [shape = 's32[1]{0}', space=sflag, size = 0x4, scoped, tag = 'scoped memory for tpu_custom_call.1']
    %8 = vsyncpa [#allocation3], 0
    // Predicated region
    $region2: #{tpu_custom_call.1} parent=1 // pred_check
      _
    $region3: #{tpu_custom_call.1} parent=1 // pred_check_branch
      %10 = sbr.rel (0) target = $region5
    $region4: #{tpu_custom_call.1} parent=1 // pred_region
      _
    $region5: #{tpu_custom_call.1} parent=1 // pred_fallthru
      _
    // Predicated region
    $region6: #{tpu_custom_call.1} parent=1 // pred_check
      _
    $region7: #{tpu_custom_call.1} parent=1 // pred_check_branch
      %12 = sbr.rel (0) target = $region9
    $region8: #{tpu_custom_call.1} parent=1 // pred_region
      _
    $region9: #{tpu_custom_call.1} parent=1 // pred_fallthru
      _
    // Predicated region
    $region10: #{tpu_custom_call.1} parent=1 // pred_check
      _
    $region11: #{tpu_custom_call.1} parent=1 // pred_check_branch
      %14 = sbr.rel (0) target = $region13
    $region12: #{tpu_custom_call.1} parent=1 // pred_region
      _
    $region13: #{tpu_custom_call.1} parent=1 // pred_fallthru
      _
    %v15 = vld [vmem:[%s0] sm:$0xff]
    %v16 = vld [vmem:[%s1] sm:$0xff]
    %v17 = vld [vmem:[%s2] sm:$0x1]
    %vm18 = vcmask 31744
    %v19 = vsel %vm18, %v15, -inf
    %20 = vmax.xlane.f32.xlu0 %v19
    %v21 = vpop.xlane.xlu0 %20
    %v22 = vsub.f32 %v15, %v21
    %v23 = vmul.f32 %v22, 1.442695
    %v24 = vpow.pop %v23
    %v25 = vsel %vm18, %v24, 0.0
    %26 = vadd.xlane.f32.xlu0 %v25
    %v27 = vpop.xlane.xlu0 %26
    %v28 = vlog2.pop %v27
    %v29 = vmul.f32 %v28, 0.6931472
    %v30 = vlaneseq
    %v31 = vand.u32 %v30, 127
    %32 = vset.pattern.permute.xlu0 0
    %33 = vperm.xlu0 %32, %v16
    %v34 = vpop.permute.xlu0 %33
    %vm35 = vcmp.eq.s32.totalorder %v31, %v34
    %v36 = vsel %vm35, 1, 0
    %v37 = vcvt.s32.f32 %v36
    %v38 = vmul.f32 %v15, %v37
    %v39 = vsel %vm18, %v38, 0.0
    %40 = vadd.xlane.f32.xlu0 %v39
    %v41 = vpop.xlane.xlu0 %40
    %v43 = vlaneseq
    %v44 = vshrl.u32 %v43, 7
    %v45 = vsub.s32 0, %v44
    %v46 = vrot.slane %v17, %v45
    %v48 = vmul.f32 %v46, %v37
    %v49 = vsel %vm18, %v48, 0.0
    %50 = vadd.xlane.f32.xlu0 %v49
    %v51 = vpop.xlane.xlu0 %50
    %v52 = vadd.f32 %v29, %v21
    %v53 = vsub.f32 %v52, %v41
    %v54 = vsub.f32 0.0, %v53
    %v55 = vmul.f32 %v54, 1.442695
    %v56 = vpow.pop %v55
    %v57 = vsub.f32 1.0, %v56
    %v58 = vmax.f32 %v57, 0.0
    %v59 = vmul.f32 %v58, %v58
    %v60 = vmul.f32 %v51, %v59
    %v61 = vmul.f32 %v60, %v53
    %s62 = smul.u32 0, 8
    %v63 = vlaneseq
    %v64 = vshrl.u32 %v63, 7
    %v65 = vstv %s62
    %v66 = vadd.s32 %v65, %v64
    %vm67 = vcmp.lt.s32.totalorder %v66, 8
    %v68 = vsel %vm67, %v61, 0.0
    %vm69 = vcmask 7168
    %v70 = vsel %vm69, %v68, 0.0
    %71 = vadd.xlane.f32.xlu0 %v70
    %v72 = vpop.xlane.xlu0 %71
    %v73 = vrot.slane %v72, 4
    %v74 = vadd.f32 %v72, %v73
    %v75 = vrot.slane %v74, 2
    %v76 = vadd.f32 %v74, %v75
    %v77 = vrot.slane %v76, 1
    %v78 = vadd.f32 %v76, %v77
    %s79 = vtos %v78
    %v80 = vstv %s79
    %v81 = vadd.f32 %v80, 0.0
    %82 = vst [vmem:[#allocation2] sm:$0x1] %v81
    // Predicated region
    $region14: #{tpu_custom_call.1} parent=1 // pred_check
      _
    $region15: #{tpu_custom_call.1} parent=1 // pred_check_branch
      %84 = sbr.rel (0) target = $region17
    $region16: #{tpu_custom_call.1} parent=1 // pred_region
      %s86 = ssub.s32 16, 16
      %87 = vsyncadd [#allocation3], %s86
      %s89 = sshll.u32 [#allocation2], 4
      %s90 = int_to_ptr.vmem [resolvable:$true] %s89
      %92 = dma.vmem_to_hbm [thread:$0]  %s90, 16, %s3, [#allocation3]
    $region17: #{tpu_custom_call.1} parent=1 // pred_fallthru
      _
    // Predicated region
    $region18: #{tpu_custom_call.1} parent=1 // pred_check
      _
    $region19: #{tpu_custom_call.1} parent=1 // pred_check_branch
      %94 = sbr.rel (0) target = $region21
    $region20: #{tpu_custom_call.1} parent=1 // pred_region
      %95 = dma.done [#allocation3], 16
    $region21: #{tpu_custom_call.1} parent=1 // pred_fallthru
      _
    %96 = vsyncpa [#allocation3], 1

</llo_original>
